<compile_context>
chip_gen: v5e
topology: v5e:2x2
jax: 0.10.0
libtpu: 0.0.40
codegen_flags: <defaults>
</compile_context>

<pallas_src>
import functools
import math

import jax
import jax.numpy as jnp
from jax.experimental import pallas as pl
from jax.experimental.pallas import tpu as pltpu


_ROW_ALIGN = 16                        # bf16 packs 16 rows / sublane group (also 8-aligned for f32)
_VMEM_TILE_BUDGET = 32 * 1024 * 1024   # keep double-buffered tile footprint under this (v7x-safe)


def _round_up(x, m):
    return ((x + m - 1) // m) * m


def _vmem_footprint(tile_m, H, x_item, r_item, out_item, w_item):
    """Rough VMEM bytes for one grid step with default double-buffering."""
    io_tiles = tile_m * H * (x_item + r_item + out_item)   # per-buffer row tiles
    const = H * H * w_item + 3 * H * 4                     # resident weight + bias/gamma/beta
    f32_scratch = 4 * tile_m * H * 4                       # in-kernel f32 intermediates
    return 2 * (io_tiles + const) + f32_scratch


def _self_output_kernel(x_ref, wt_ref, res_ref, b_ref, g_ref, beta_ref, o_ref,
                        *, eps, compute_dtype):
    # x_ref:   (tile_m, H) native activation dtype — cast to compute dtype in-register
    # wt_ref:  (H, H)      compute dtype, already transposed to (in, out)
    # res_ref: (tile_m, H) native residual dtype — cast to f32 in-register
    # b_ref/g_ref/beta_ref: (1, H) f32
    # o_ref:   (tile_m, H) output dtype
    x = x_ref[...].astype(compute_dtype)

    # x @ W^T on the MXU with f32 accumulation; weight is pre-transposed so the
    # contraction is plain (1, 0) — no in-kernel transpose of the weight tile.
    y = jax.lax.dot_general(
        x, wt_ref[...],
        dimension_numbers=(((1,), (0,)), ((), ())),
        preferred_element_type=jnp.float32,
    )
    y = y + b_ref[...]                          # bias (f32)
    y = y + res_ref[...].astype(jnp.float32)    # residual add (f32)

    # LayerNorm over the hidden dim, biased variance like F.layer_norm.
    mean = jnp.mean(y, axis=-1, keepdims=True)
    yc = y - mean
    var = jnp.mean(yc * yc, axis=-1, keepdims=True)
    inv = jax.lax.rsqrt(var + eps)              # EUP rsqrt
    out = yc * inv * g_ref[...] + beta_ref[...]

    o_ref[...] = out.astype(o_ref.dtype)


def meta_bert_self_output(
    hidden_states,    # (B, S, H)  activations
    input_tensor,     # (B, S, H)  residual
    weight,           # (H, H)     PyTorch F.linear layout (out_features, in_features)
    bias,             # (H,)
    ln_weight,        # (H,)       LayerNorm gamma
    ln_bias,          # (H,)       LayerNorm beta
    *,
    eps=1e-12,
    tm=None,
    compute_dtype=jnp.bfloat16,
    out_dtype=None,
):
    B, S, H = hidden_states.shape
    M = B * S
    if out_dtype is None:
        out_dtype = hidden_states.dtype

    # No wrapper-side dtype casts of the big activation tensors (those would be
    # an extra un-hidden HBM pass); the kernel casts in-register.
    x2d = hidden_states.reshape(M, H)
    r2d = input_tensor.reshape(M, H)

    # One-time weight cast + transpose to (in, out); fused by XLA, O(H^2) only.
    w_t = jnp.transpose(weight.astype(compute_dtype))

    b2d = bias.reshape(1, H).astype(jnp.float32)
    g2d = ln_weight.reshape(1, H).astype(jnp.float32)
    beta2d = ln_bias.reshape(1, H).astype(jnp.float32)

    x_item = jnp.dtype(x2d.dtype).itemsize
    r_item = jnp.dtype(r2d.dtype).itemsize
    o_item = jnp.dtype(out_dtype).itemsize
    w_item = jnp.dtype(compute_dtype).itemsize

    # Row-tile selection: large tiles amortize the ~0.35 us per-grid-step overhead
    # in this HBM-bound kernel; shrink so the double-buffered footprint fits the
    # v7x-safe VMEM budget. Never exceed M (partial last block handles the tail).
    if tm is None:
        tm = 1024 if M >= 8192 else 512
    if M < _ROW_ALIGN:
        tile_m = M                                         # full-extent block for tiny inputs
    else:
        tile_m = min(_round_up(tm, _ROW_ALIGN), (M // _ROW_ALIGN) * _ROW_ALIGN)
        tile_m = max(tile_m, _ROW_ALIGN)
        while (tile_m > _ROW_ALIGN and
               _vmem_footprint(tile_m, H, x_item, r_item, o_item, w_item) > _VMEM_TILE_BUDGET):
            tile_m = max(_ROW_ALIGN, ((tile_m // 2) // _ROW_ALIGN) * _ROW_ALIGN)

    # Ragged tail handled via partial blocks — no jnp.pad HBM copy.
    grid = (pl.cdiv(M, tile_m),)

    vmem_limit = int(min(
        48 * 1024 * 1024,
        max(16 * 1024 * 1024,
            2 * _vmem_footprint(tile_m, H, x_item, r_item, o_item, w_item)),
    ))

    bytes_accessed = (
        M * H * (x_item + r_item + o_item)   # activations + residual + output
        + H * H * w_item                     # resident weight (counted once)
        + 3 * H * 4                          # bias / gamma / beta
    )
    cost = pl.CostEstimate(
        flops=2 * M * H * H,
        transcendentals=M,                   # one rsqrt per row
        bytes_accessed=bytes_accessed,
    )

    out2d = pl.pallas_call(
        functools.partial(_self_output_kernel, eps=eps, compute_dtype=compute_dtype),
        out_shape=jax.ShapeDtypeStruct((M, H), out_dtype),
        grid_spec=pltpu.PrefetchScalarGridSpec(
            num_scalar_prefetch=0,
            grid=grid,
            in_specs=[
                pl.BlockSpec((tile_m, H), lambda i: (i, 0)),  # activation row tile
                pl.BlockSpec((H, H), lambda i: (0, 0)),       # weight^T (grid-invariant, resident)
                pl.BlockSpec((tile_m, H), lambda i: (i, 0)),  # residual row tile
                pl.BlockSpec((1, H), lambda i: (0, 0)),       # bias
                pl.BlockSpec((1, H), lambda i: (0, 0)),       # LayerNorm gamma
                pl.BlockSpec((1, H), lambda i: (0, 0)),       # LayerNorm beta
            ],
            out_specs=pl.BlockSpec((tile_m, H), lambda i: (i, 0)),
        ),
        compiler_params=pltpu.CompilerParams(
            dimension_semantics=("parallel",),
            vmem_limit_bytes=vmem_limit,
        ),
        cost_estimate=cost,
    )(x2d, w_t, r2d, b2d, g2d, beta2d)

    return out2d.reshape(B, S, H)


def init_params(key, hidden_size):
    # MetaLinearLayer: Xavier-uniform weight (out, in), zero bias.
    # MetaLayerNormLayer: weight (gamma) ones, bias (beta) zeros.
    bound = math.sqrt(6.0 / (hidden_size + hidden_size))
    weight = jax.random.uniform(
        key, (hidden_size, hidden_size),
        minval=-bound, maxval=bound, dtype=jnp.float32)
    bias = jnp.zeros((hidden_size,), dtype=jnp.float32)
    gamma = jnp.ones((hidden_size,), dtype=jnp.float32)
    beta = jnp.zeros((hidden_size,), dtype=jnp.float32)
    return weight, bias, gamma, beta


def _reference(hidden_states, input_tensor, weight, bias, gamma, beta, eps):
    B, S, H = hidden_states.shape
    x = hidden_states.reshape(B * S, H)
    r = input_tensor.reshape(B * S, H)
    y = jnp.matmul(x, weight.T, precision=jax.lax.Precision.HIGHEST) + bias
    y = y + r
    mean = y.mean(-1, keepdims=True)
    var = ((y - mean) ** 2).mean(-1, keepdims=True)
    out = (y - mean) / jnp.sqrt(var + eps) * gamma + beta
    return out.reshape(B, S, H)


if __name__ == "__main__":
    key = jax.random.PRNGKey(0)
    k_x, k_r, k_w, k_g, k_b = jax.random.split(key, 5)

    B, S, H = 2, 8, 32          # batch, seq, hidden_size
    eps = 1e-12

    hidden_states = jax.random.normal(k_x, (B, S, H), dtype=jnp.float32)
    input_tensor = jax.random.normal(k_r, (B, S, H), dtype=jnp.float32)
    weight, bias, gamma, beta = init_params(k_w, H)
    # Perturb the LayerNorm affine params so they are actually exercised.
    gamma = gamma + 0.1 * jax.random.normal(k_g, (H,), dtype=jnp.float32)
    beta = beta + 0.1 * jax.random.normal(k_b, (H,), dtype=jnp.float32)

    ref = _reference(hidden_states, input_tensor, weight, bias, gamma, beta, eps)

    # Fast path: bf16 MXU inputs, f32 accumulation / LayerNorm.
    out_bf16 = meta_bert_self_output(
        hidden_states, input_tensor, weight, bias, gamma, beta, eps=eps)
    out_bf16 = jax.block_until_ready(out_bf16)
    assert out_bf16.shape == (B, S, H)
    assert jnp.allclose(out_bf16, ref, atol=3e-2, rtol=3e-2)

    # Full-precision path for a tighter numerical check of the fused kernel.
    out_f32 = meta_bert_self_output(
        hidden_states, input_tensor, weight, bias, gamma, beta,
        eps=eps, compute_dtype=jnp.float32)
    out_f32 = jax.block_until_ready(out_f32)
    assert out_f32.shape == (B, S, H)
    assert jnp.allclose(out_f32, ref, atol=5e-3, rtol=5e-3)

    print("KERNEL_OK")
</pallas_src>

<mosaic_0001>
module attributes {stable_mosaic.version = 11 : i64} {
  func.func @_self_output_kernel(%arg0: i32, %arg1: memref<16x32xf32, #tpu.memory_space<vmem>>, %arg2: memref<32x32xbf16, #tpu.memory_space<vmem>>, %arg3: memref<16x32xf32, #tpu.memory_space<vmem>>, %arg4: memref<1x32xf32, #tpu.memory_space<vmem>>, %arg5: memref<1x32xf32, #tpu.memory_space<vmem>>, %arg6: memref<1x32xf32, #tpu.memory_space<vmem>>, %arg7: memref<16x32xf32, #tpu.memory_space<vmem>>) attributes {dimension_semantics = [#tpu.dimension_semantics<parallel>], iteration_bounds = array<i64: 1>, scalar_prefetch = 0 : i64, scratch_operands = 0 : i64, tpu.core_type = #tpu.core_type<tc>, window_params = [{transform_indices = @transform_0, window_bounds = array<i64: 16, 32>}, {pipeline_mode = #tpu.pipeline_mode<synchronous>, transform_indices = @transform_1, window_bounds = array<i64: 32, 32>}, {transform_indices = @transform_2, window_bounds = array<i64: 16, 32>}, {pipeline_mode = #tpu.pipeline_mode<synchronous>, transform_indices = @transform_3, window_bounds = array<i64: 1, 32>}, {pipeline_mode = #tpu.pipeline_mode<synchronous>, transform_indices = @transform_4, window_bounds = array<i64: 1, 32>}, {pipeline_mode = #tpu.pipeline_mode<synchronous>, transform_indices = @transform_5, window_bounds = array<i64: 1, 32>}, {transform_indices = @transform_6, window_bounds = array<i64: 16, 32>}]} {
    %c0 = arith.constant 0 : index
    %c0_0 = arith.constant 0 : index
    %0 = vector.load %arg1[%c0, %c0_0] : memref<16x32xf32, #tpu.memory_space<vmem>>, vector<16x32xf32>
    %1 = arith.truncf %0 : vector<16x32xf32> to vector<16x32xbf16>
    %c0_1 = arith.constant 0 : index
    %c0_2 = arith.constant 0 : index
    %2 = vector.load %arg2[%c0_1, %c0_2] : memref<32x32xbf16, #tpu.memory_space<vmem>>, vector<32x32xbf16>
    %cst = arith.constant dense<0.000000e+00> : vector<16x32xf32>
    %3 = tpu.matmul %1, %2, %cst {dimension_numbers = #tpu.dot_dimension_numbers<[1], [0], [0], [1], [0, 0, 1, 1], [], []>} : vector<16x32xbf16>, vector<32x32xbf16>, vector<16x32xf32> -> vector<16x32xf32>
    %c0_3 = arith.constant 0 : index
    %c0_4 = arith.constant 0 : index
    %4 = vector.load %arg4[%c0_3, %c0_4] : memref<1x32xf32, #tpu.memory_space<vmem>>, vector<1x32xf32>
    %5 = vector.broadcast %4 : vector<1x32xf32> to vector<16x32xf32>
    %6 = arith.addf %3, %5 : vector<16x32xf32>
    %c0_5 = arith.constant 0 : index
    %c0_6 = arith.constant 0 : index
    %7 = vector.load %arg3[%c0_5, %c0_6] : memref<16x32xf32, #tpu.memory_space<vmem>>, vector<16x32xf32>
    %8 = arith.addf %6, %7 : vector<16x32xf32>
    %cst_7 = arith.constant dense<0.000000e+00> : vector<16xf32>
    %9 = vector.multi_reduction <add>, %8, %cst_7 [1] : vector<16x32xf32> to vector<16xf32>
    %10 = vector.shape_cast %9 : vector<16xf32> to vector<16x1xf32>
    %cst_8 = arith.constant 3.200000e+01 : f32
    %11 = vector.broadcast %cst_8 : f32 to vector<16x1xf32>
    %12 = arith.divf %10, %11 : vector<16x1xf32>
    %13 = vector.broadcast %12 : vector<16x1xf32> to vector<16x32xf32>
    %14 = arith.subf %8, %13 : vector<16x32xf32>
    %15 = arith.mulf %14, %14 : vector<16x32xf32>
    %cst_9 = arith.constant dense<0.000000e+00> : vector<16xf32>
    %16 = vector.multi_reduction <add>, %15, %cst_9 [1] : vector<16x32xf32> to vector<16xf32>
    %17 = vector.shape_cast %16 : vector<16xf32> to vector<16x1xf32>
    %cst_10 = arith.constant 3.200000e+01 : f32
    %18 = vector.broadcast %cst_10 : f32 to vector<16x1xf32>
    %19 = arith.divf %17, %18 : vector<16x1xf32>
    %cst_11 = arith.constant 9.99999996E-13 : f32
    %20 = vector.broadcast %cst_11 : f32 to vector<16x1xf32>
    %21 = arith.addf %19, %20 : vector<16x1xf32>
    %22 = math.rsqrt %21 : vector<16x1xf32>
    %23 = vector.broadcast %22 : vector<16x1xf32> to vector<16x32xf32>
    %24 = arith.mulf %14, %23 : vector<16x32xf32>
    %c0_12 = arith.constant 0 : index
    %c0_13 = arith.constant 0 : index
    %25 = vector.load %arg5[%c0_12, %c0_13] : memref<1x32xf32, #tpu.memory_space<vmem>>, vector<1x32xf32>
    %26 = vector.broadcast %25 : vector<1x32xf32> to vector<16x32xf32>
    %27 = arith.mulf %24, %26 : vector<16x32xf32>
    %c0_14 = arith.constant 0 : index
    %c0_15 = arith.constant 0 : index
    %28 = vector.load %arg6[%c0_14, %c0_15] : memref<1x32xf32, #tpu.memory_space<vmem>>, vector<1x32xf32>
    %29 = vector.broadcast %28 : vector<1x32xf32> to vector<16x32xf32>
    %30 = arith.addf %27, %29 : vector<16x32xf32>
    %c0_16 = arith.constant 0 : index
    %c0_17 = arith.constant 0 : index
    %31 = vector.load %arg7[%c0_16, %c0_17] : memref<16x32xf32, #tpu.memory_space<vmem>>, vector<16x32xf32>
    tpu.vector_store %arg7[%c0_16, %c0_17], %30 {strides = array<i32>} : memref<16x32xf32, #tpu.memory_space<vmem>>, vector<16x32xf32>,
    return
  }
  func.func @transform_0(%arg0: i32) -> (i32, i32) {
    %c0_i32 = arith.constant 0 : i32
    %c0_i32_0 = arith.constant 0 : i32
    return %arg0, %c0_i32 : i32, i32
  }
  func.func @transform_1(%arg0: i32) -> (i32, i32) {
    %c0_i32 = arith.constant 0 : i32
    %c0_i32_0 = arith.constant 0 : i32
    %c0_i32_1 = arith.constant 0 : i32
    return %c0_i32, %c0_i32_0 : i32, i32
  }
  func.func @transform_2(%arg0: i32) -> (i32, i32) {
    %c0_i32 = arith.constant 0 : i32
    %c0_i32_0 = arith.constant 0 : i32
    return %arg0, %c0_i32 : i32, i32
  }
  func.func @transform_3(%arg0: i32) -> (i32, i32) {
    %c0_i32 = arith.constant 0 : i32
    %c0_i32_0 = arith.constant 0 : i32
    %c0_i32_1 = arith.constant 0 : i32
    return %c0_i32, %c0_i32_0 : i32, i32
  }
  func.func @transform_4(%arg0: i32) -> (i32, i32) {
    %c0_i32 = arith.constant 0 : i32
    %c0_i32_0 = arith.constant 0 : i32
    %c0_i32_1 = arith.constant 0 : i32
    return %c0_i32, %c0_i32_0 : i32, i32
  }
  func.func @transform_5(%arg0: i32) -> (i32, i32) {
    %c0_i32 = arith.constant 0 : i32
    %c0_i32_0 = arith.constant 0 : i32
    %c0_i32_1 = arith.constant 0 : i32
    return %c0_i32, %c0_i32_0 : i32, i32
  }
  func.func @transform_6(%arg0: i32) -> (i32, i32) {
    %c0_i32 = arith.constant 0 : i32
    %c0_i32_0 = arith.constant 0 : i32
    return %arg0, %c0_i32 : i32, i32
  }
}

</mosaic_0001>

<llo_original>
// kernel: tpu_custom_call.1
$region0: #{tpu_custom_call.1}
  #allocation0 [shape = 'u32[]', space=smem, size = 0x4, offset = 0x4, fixed_abs, tag = 'smem constant byte address 0x4 - core index']
  #allocation1 [shape = 'u32[72,128]{1,0:T(1,128)}', space=vmem, size = 0x9000, scoped, tag = 'internal scratch']
  %s0 = inlined_call_operand.hbm [shape: f32[16,32], index: 0, kind: input, shape index: {}]
  %s1 = inlined_call_operand.hbm [shape: bf16[32,32], index: 1, kind: input, shape index: {}]
  %s2 = inlined_call_operand.hbm [shape: f32[16,32], index: 2, kind: input, shape index: {}]
  %s3 = inlined_call_operand.vmem [shape: f32[1,32], index: 3, kind: input, shape index: {}]
  %s4 = inlined_call_operand.vmem [shape: f32[1,32], index: 4, kind: input, shape index: {}]
  %s5 = inlined_call_operand.vmem [shape: f32[1,32], index: 5, kind: input, shape index: {}]
  %s6 = inlined_call_operand.hbm [shape: f32[16,32], index: 6, kind: output, shape index: {}]
  %s7 = sld [smem:[#allocation0]]
  $region46: #{tpu_custom_call.1} parent=0
    _
  %s9 = ssub.s32 1, %s7
  %s10 = scalar_select 0, %s9, %s7
  $region1: #{tpu_custom_call.1} parent=0
    #allocation2 [shape = 'u8[8192]{0}', space=vmem, size = 0x2000, scoped, tag = 'input window, operand 0, single buffered']
    #allocation3 [shape = 's32[1]{0}', space=sflag, size = 0x4, scoped, tag = 'scoped memory for tpu_custom_call.1']
    #allocation4 [shape = 's32[1]{0}', space=sflag, size = 0x4, scoped, tag = 'scoped memory for tpu_custom_call.1']
    #allocation5 [shape = 'u8[8192]{0}', space=vmem, size = 0x2000, scoped, tag = 'input window, operand 1, single buffered']
    #allocation6 [shape = 's32[1]{0}', space=sflag, size = 0x4, scoped, tag = 'scoped memory for tpu_custom_call.1']
    #allocation7 [shape = 'u8[8192]{0}', space=vmem, size = 0x2000, scoped, tag = 'input window, operand 2, single buffered']
    #allocation8 [shape = 'u8[8192]{0}', space=vmem, size = 0x2000, scoped, tag = 'output window, operand 0, single buffered']
    %11 = vsyncpa [#allocation3], 0
    %12 = vsyncpa [#allocation6], 0
    %13 = vsyncpa [#allocation4], 0
    // Predicated region
    $region2: #{tpu_custom_call.1} parent=1 // pred_check
      _
    $region3: #{tpu_custom_call.1} parent=1 // pred_check_branch
      %15 = sbr.rel (0) target = $region5
    $region4: #{tpu_custom_call.1} parent=1 // pred_region
      %17 = vsyncadd [#allocation3], 0
      %s18 = sshll.u32 %s0, 4
      %s19 = int_to_ptr.hbm [resolvable:$true] %s18
      %s20 = sshll.u32 [#allocation2], 4
      %s21 = int_to_ptr.vmem [resolvable:$true] %s20
      %26 = dma.hbm_to_vmem [thread:$0]  %s19, 256, %s21, [#allocation3], 128, 128, 8
    $region5: #{tpu_custom_call.1} parent=1 // pred_fallthru
      _
    // Predicated region
    $region6: #{tpu_custom_call.1} parent=1 // pred_check
      _
    $region7: #{tpu_custom_call.1} parent=1 // pred_check_branch
      %28 = sbr.rel (0) target = $region9
    $region8: #{tpu_custom_call.1} parent=1 // pred_region
      %30 = vsyncadd [#allocation6], 0
      %s31 = sshll.u32 %s1, 4
      %s32 = int_to_ptr.hbm [resolvable:$true] %s31
      %s33 = sshll.u32 [#allocation5], 4
      %s34 = int_to_ptr.vmem [resolvable:$true] %s33
      %39 = dma.hbm_to_vmem [thread:$0]  %s32, 256, %s34, [#allocation6], 64, 64, 4
    $region9: #{tpu_custom_call.1} parent=1 // pred_fallthru
      _
    // Predicated region
    $region10: #{tpu_custom_call.1} parent=1 // pred_check
      _
    $region11: #{tpu_custom_call.1} parent=1 // pred_check_branch
      %41 = sbr.rel (0) target = $region13
    $region12: #{tpu_custom_call.1} parent=1 // pred_region
      %43 = vsyncadd [#allocation6], 0
      %s44 = sshll.u32 %s2, 4
      %s45 = int_to_ptr.hbm [resolvable:$true] %s44
      %s46 = sshll.u32 [#allocation7], 4
      %s47 = int_to_ptr.vmem [resolvable:$true] %s46
      %52 = dma.hbm_to_vmem [thread:$0]  %s45, 256, %s47, [#allocation6], 128, 128, 8
    $region13: #{tpu_custom_call.1} parent=1 // pred_fallthru
      _
    // Predicated region
    $region14: #{tpu_custom_call.1} parent=1 // pred_check
      _
    $region15: #{tpu_custom_call.1} parent=1 // pred_check_branch
      %54 = sbr.rel (0) target = $region17
    $region16: #{tpu_custom_call.1} parent=1 // pred_region
      _
    $region17: #{tpu_custom_call.1} parent=1 // pred_fallthru
      _
    // Predicated region
    $region18: #{tpu_custom_call.1} parent=1 // pred_check
      _
    $region19: #{tpu_custom_call.1} parent=1 // pred_check_branch
      %56 = sbr.rel (0) target = $region21
    $region20: #{tpu_custom_call.1} parent=1 // pred_region
      _
    $region21: #{tpu_custom_call.1} parent=1 // pred_fallthru
      _
    // Predicated region
    $region22: #{tpu_custom_call.1} parent=1 // pred_check
      _
    $region23: #{tpu_custom_call.1} parent=1 // pred_check_branch
      %58 = sbr.rel (0) target = $region25
    $region24: #{tpu_custom_call.1} parent=1 // pred_region
      _
    $region25: #{tpu_custom_call.1} parent=1 // pred_fallthru
      _
    // Predicated region
    $region26: #{tpu_custom_call.1} parent=1 // pred_check
      _
    $region27: #{tpu_custom_call.1} parent=1 // pred_check_branch
      %60 = sbr.rel (0) target = $region29
    $region28: #{tpu_custom_call.1} parent=1 // pred_region
      %62 = dma.done [#allocation3], 256
    $region29: #{tpu_custom_call.1} parent=1 // pred_fallthru
      _
    // Predicated region
    $region30: #{tpu_custom_call.1} parent=1 // pred_check
      _
    $region31: #{tpu_custom_call.1} parent=1 // pred_check_branch
      %64 = sbr.rel (0) target = $region33
    $region32: #{tpu_custom_call.1} parent=1 // pred_region
      %66 = dma.done [#allocation6], 256
    $region33: #{tpu_custom_call.1} parent=1 // pred_fallthru
      _
    // Predicated region
    $region34: #{tpu_custom_call.1} parent=1 // pred_check
      _
    $region35: #{tpu_custom_call.1} parent=1 // pred_check_branch
      %68 = sbr.rel (0) target = $region37
    $region36: #{tpu_custom_call.1} parent=1 // pred_region
      %70 = dma.done [#allocation6], 256
    $region37: #{tpu_custom_call.1} parent=1 // pred_fallthru
      _
    %v72 = vld [vmem:[#allocation2] sm:$0xff]
    %v73 = vld [vmem:[#allocation2 + $0x8] sm:$0xff]
    %v74 = vpack.c.bf16 %v73, %v72
    %v75 = vld [vmem:[#allocation5] sm:$0xf]
    %v76 = vld [vmem:[#allocation5 + $0x4] sm:$0xf]
    %v77 = vld [vmem:[#allocation5 + $0x8] sm:$0xf]
    %v78 = vld [vmem:[#allocation5 + $0xc] sm:$0xf]
    %v79 = vld [vmem:[%s3] sm:$0x1]
    %v81 = vperm.slane %v79, 0
    %v87 = vunpack.c.l.b16 %v75
    %v88 = vunpack.c.l.b16 %v76
    %v89 = vunpack.c.l.b16 %v77
    %v90 = vunpack.c.l.b16 %v78
    %v91 = vpack.c.b16 %v88, %v87
    %v92 = vpack.c.b16 %v90, %v89
    %vm95 = vcmask 261120
    %v97 = vsel %vm95, %v74, 0
    %99 = vmatpush.bf16.msra.mxu0 0
    %100 = vmatpush.bf16.msra.mxu0 0
    %101 = vmatpush.bf16.msra.mxu0 0
    %102 = vmatpush.bf16.msra.mxu0 0
    %103 = vmatpush.bf16.msra.mxu0 0
    %104 = vmatpush.bf16.msra.mxu0 0
    %105 = vmatpush.bf16.msra.mxu0 %v92
    %106 = vmatpush.bf16.msra.mxu0 %v91
    %107 = vmatmul.bf16.gmra.mxu0 %v97
    %v108 = vpop.f32.mrf.mxu0
    %v109 = vadd.f32 %v81, %v108
    %v110 = vpop.f32.mrf.mxu0
    %v111 = vadd.f32 %v81, %v110
    %112 = vdwg.mxu0
    %v113 = vld [vmem:[#allocation7] sm:$0xff]
    %v114 = vld [vmem:[#allocation7 + $0x8] sm:$0xff]
    %v115 = vadd.f32 %v109, %v113
    %v116 = vadd.f32 %v111, %v114
    %v117 = vsel %vm95, %v115, 0.0
    %118 = vadd.xlane.f32.xlu0 %v117
    %v119 = vpop.xlane.xlu0 %118
    %v120 = vsel %vm95, %v116, 0.0
    %121 = vadd.xlane.f32.xlu0 %v120
    %v122 = vpop.xlane.xlu0 %121
    %v123 = vrcp.pop 32.0
    %v124 = vmul.f32 32.0, %v123
    %v125 = vsub.f32 1.0, %v124
    %v126 = vmul.f32 %v123, %v125
    %v127 = vadd.f32 %v123, %v126
    %vm128 = vweird.f32 %v123
    %v129 = vsel %vm128, %v123, %v127
    %v130 = vmul.f32 %v119, %v129
    %v131 = vmul.f32 %v122, %v129
    %v132 = vsub.f32 %v115, %v130
    %v133 = vsub.f32 %v116, %v131
    %v134 = vmul.f32 %v132, %v132
    %v135 = vmul.f32 %v133, %v133
    %v136 = vsel %vm95, %v134, 0.0
    %137 = vadd.xlane.f32.xlu0 %v136
    %v138 = vpop.xlane.xlu0 %137
    %v139 = vsel %vm95, %v135, 0.0
    %140 = vadd.xlane.f32.xlu0 %v139
    %v141 = vpop.xlane.xlu0 %140
    %v142 = vmul.f32 %v138, %v129
    %v143 = vmul.f32 %v141, %v129
    %v144 = vadd.f32 %v142, 1e-12
    %v145 = vadd.f32 %v143, 1e-12
    %v146 = vrsqrt.pop %v144
    %v147 = vmul.f32 %v146, %v144
    %v148 = vmul.f32 %v147, %v146
    %v149 = vmul.f32 0.5, %v148
    %v150 = vsub.f32 1.5, %v149
    %v151 = vmul.f32 %v146, %v150
    %vm152 = vweird.f32 %v144
    %vm153 = vweird.f32 %v146
    %vm154 = vmor %vm152, %vm153
    %v155 = vsel %vm154, %v146, %v151
    %v156 = vrsqrt.pop %v145
    %v157 = vmul.f32 %v156, %v145
    %v158 = vmul.f32 %v157, %v156
    %v159 = vmul.f32 0.5, %v158
    %v160 = vsub.f32 1.5, %v159
    %v161 = vmul.f32 %v156, %v160
    %vm162 = vweird.f32 %v145
    %vm163 = vweird.f32 %v156
    %vm164 = vmor %vm162, %vm163
    %v165 = vsel %vm164, %v156, %v161
    %v166 = vmul.f32 %v132, %v155
    %v167 = vmul.f32 %v133, %v165
    %v168 = vld [vmem:[%s4] sm:$0x1]
    %v170 = vperm.slane %v168, 0
    %v172 = vmul.f32 %v166, %v170
    %v173 = vmul.f32 %v167, %v170
    %v174 = vld [vmem:[%s5] sm:$0x1]
    %v176 = vperm.slane %v174, 0
    %v178 = vadd.f32 %v172, %v176
    %v179 = vadd.f32 %v173, %v176
    %180 = vst.msk [vmem:[#allocation8] sm:$0xff] %vm95, %v178
    %181 = vst.msk [vmem:[#allocation8 + $0x8] sm:$0xff] %vm95, %v179
    // Predicated region
    $region38: #{tpu_custom_call.1} parent=1 // pred_check
      _
    $region39: #{tpu_custom_call.1} parent=1 // pred_check_branch
      %183 = sbr.rel (0) target = $region41
    $region40: #{tpu_custom_call.1} parent=1 // pred_region
      %185 = vsyncadd [#allocation4], 0
      %s186 = sshll.u32 [#allocation8], 4
      %s187 = int_to_ptr.vmem [resolvable:$true] %s186
      %s188 = sshll.u32 %s6, 4
      %s189 = int_to_ptr.hbm [resolvable:$true] %s188
      %194 = dma.vmem_to_hbm [thread:$0]  %s187, 256, %s189, [#allocation4], 128, 128, 8
    $region41: #{tpu_custom_call.1} parent=1 // pred_fallthru
      _
    // Predicated region
    $region42: #{tpu_custom_call.1} parent=1 // pred_check
      _
    $region43: #{tpu_custom_call.1} parent=1 // pred_check_branch
      %196 = sbr.rel (0) target = $region45
    $region44: #{tpu_custom_call.1} parent=1 // pred_region
      %198 = dma.done [#allocation4], 256
    $region45: #{tpu_custom_call.1} parent=1 // pred_fallthru
      _
    %199 = vsyncpa [#allocation3], 1
    %200 = vsyncpa [#allocation6], 1
    %201 = vsyncpa [#allocation4], 1

</llo_original>
